<compile_context>
chip_gen: v6e
topology: v6e:2x2x1
jax: 0.10.0
libtpu: 0.0.40
codegen_flags: <defaults>
</compile_context>

<pallas_src>
import jax
import jax.numpy as jnp
from jax import lax
from jax.experimental import pallas as pl
from jax.experimental.pallas import tpu as pltpu


# -----------------------------------------------------------------------------
# Fused kernel (per batch):
#   x_taps : (9C, N)  im2col slab (tap-major rows; centre tap = original x)
#   w2     : (C, 9C)  conv weights (BN scale folded in), matching tap ordering
#   shift  : (C, 1)   (conv_b - mean) * scale + bn_b
#   gamma  : (1, 1)   scalar residual weight (SMEM)
#   out    : (C, N)
# -----------------------------------------------------------------------------
def fused_texture_attention_kernel(xt_ref, w2_ref, shift_ref, gamma_ref, o_ref):
    C, N = o_ref.shape

    # ---- conv3x3 as ONE MXU matmul over K = 9C, folded BN, ReLU ----
    tex = jnp.dot(w2_ref[...], xt_ref[...],
                  preferred_element_type=jnp.float32)                  # (C, N)
    tex = jnp.maximum(tex + shift_ref[...], 0.0)

    # ---- F.normalize(dim=channel) with temperature folded in ----
    # f2 = sqrt(2) * tex / max(||tex||_2, 1e-12), so s = f2^T f2 == (f^T f)/0.5
    # without any (N, N) elementwise scaling. rsqrt runs on the EUP.
    sumsq = jnp.sum(tex * tex, axis=0, keepdims=True)                  # (1, N)
    inv_nrm = lax.rsqrt(jnp.maximum(sumsq, 1e-24))
    f2 = tex * ((2.0 ** 0.5) * inv_nrm)

    # ---- similarity logits s[i,j] = (f_i . f_j) / 0.5 (symmetric) ----
    # f2.T is only a tiny (C, N) -> (N, C) relayout; no 256x256 transpose is
    # ever materialized (see attention matmul below).
    s = jnp.dot(f2.T, f2, preferred_element_type=jnp.float32)          # (N, N)

    # ---- unnormalized softmax, exploiting symmetry of s ----
    # With m[i] = max_j s[i,j] (== column max by symmetry) define
    # q[j,i] = exp(s[j,i] - m[i]) = p[i,j]. Both reductions are over axis 0
    # (sublanes), so m and the row-sums land directly in (1, N) lane layout
    # (no relayout/transpose), and the attention matmul below is a plain
    # jnp.dot contracting the leading dim of q.  s is overwritten in place so
    # only one (N, N) buffer is live.
    s = jnp.exp(s - jnp.max(s, axis=0, keepdims=True))                 # q
    inv_den = pl.reciprocal(jnp.sum(s, axis=0, keepdims=True),
                            approx=True)                               # (1, N)

    # ---- attended = x_flat @ sim^T, with 1/rowsum folded AFTER the matmul ----
    xf = xt_ref[4 * C:5 * C, :]        # centre tap == x_flat (static ref view)
    att = jnp.dot(xf, s, preferred_element_type=jnp.float32) * inv_den # (C, N)

    o_ref[...] = (xf + gamma_ref[0, 0] * att).astype(o_ref.dtype)


# -----------------------------------------------------------------------------
# Wrapper
# -----------------------------------------------------------------------------
@jax.jit
def texture_attention_forward(x, params):
    B, C, H, W = x.shape
    N = H * W
    eps = 1e-5

    # ---- glue: im2col slab built directly in the (B, 9C, N) layout needed by
    #      the single-matmul conv (concatenate along channels; no stack and no
    #      in-kernel reshape). Tap k = dy*3 + dx occupies rows [k*C, (k+1)*C).
    x_pad = jnp.pad(x, ((0, 0), (0, 0), (1, 1), (1, 1)))
    taps = [x_pad[:, :, dy:dy + H, dx:dx + W].reshape(B, C, N)
            for dy in range(3) for dx in range(3)]
    x_taps = jnp.concatenate(taps, axis=1).astype(jnp.float32)         # (B, 9C, N)

    # conv weights as a single (C, 9C) matrix matching the tap ordering; BN
    # scale folded into the weights, shift carries the rest.
    scale = params["bn_w"] / jnp.sqrt(params["bn_var"] + eps)          # (C,)
    w2 = jnp.transpose(params["conv_w"], (0, 2, 3, 1)).reshape(C, 9 * C)
    w2 = (w2 * scale[:, None]).astype(jnp.float32)
    shift = (params["conv_b"] - params["bn_mean"]) * scale + params["bn_b"]
    shift = shift.reshape(C, 1).astype(jnp.float32)
    gamma = params["gamma"].reshape(1, 1).astype(jnp.float32)

    # ---- one fused kernel per batch. grid=(B,), "parallel" so the two
    #      batches shard across v7x's two TensorCores (serial loop elsewhere).
    out_flat = pl.pallas_call(
        fused_texture_attention_kernel,
        out_shape=jax.ShapeDtypeStruct((B, C, N), jnp.float32),
        grid_spec=pltpu.PrefetchScalarGridSpec(
            num_scalar_prefetch=0,
            grid=(B,),
            in_specs=[
                pl.BlockSpec((None, 9 * C, N), lambda b: (b, 0, 0)),
                pl.BlockSpec((C, 9 * C), lambda b: (0, 0)),
                pl.BlockSpec((C, 1), lambda b: (0, 0)),
                pl.BlockSpec((1, 1), lambda b: (0, 0),
                             memory_space=pltpu.SMEM),
            ],
            out_specs=pl.BlockSpec((None, C, N), lambda b: (b, 0, 0)),
        ),
        compiler_params=pltpu.CompilerParams(
            dimension_semantics=("parallel",)),
    )(x_taps, w2, shift, gamma)

    return out_flat.reshape(B, C, H, W)


# -----------------------------------------------------------------------------
# Pure-JAX reference (mirrors the PyTorch forward) for a correctness check.
# -----------------------------------------------------------------------------
def reference_forward(x, params):
    eps = 1e-5
    y = lax.conv_general_dilated(
        x, params["conv_w"], window_strides=(1, 1),
        padding=((1, 1), (1, 1)),
        dimension_numbers=("NCHW", "OIHW", "NCHW"))
    y = y + params["conv_b"][None, :, None, None]
    y = (y - params["bn_mean"][None, :, None, None]) / \
        jnp.sqrt(params["bn_var"] + eps)[None, :, None, None]
    y = y * params["bn_w"][None, :, None, None] + \
        params["bn_b"][None, :, None, None]
    tex = jnp.maximum(y, 0.0)

    B, C, H, W = x.shape
    N = H * W
    f = tex.reshape(B, C, N)
    f = f / jnp.maximum(jnp.sqrt(jnp.sum(f * f, axis=1, keepdims=True)), 1e-12)
    sim = jnp.einsum("bcn,bcm->bnm", f, f)
    sim = jax.nn.softmax(sim / 0.5, axis=-1)
    xf = x.reshape(B, C, N)
    att = jnp.einsum("bcj,bij->bci", xf, sim)
    out = xf + params["gamma"].reshape(()) * att
    return out.reshape(B, C, H, W)


# -----------------------------------------------------------------------------
# Main
# -----------------------------------------------------------------------------
if __name__ == "__main__":
    B, C, H, W = 2, 4, 16, 16

    key = jax.random.PRNGKey(0)
    kx, kw, kb, kbw, kbb, kbm, kbv = jax.random.split(key, 7)

    x = jax.random.normal(kx, (B, C, H, W), dtype=jnp.float32)

    params = {
        # nn.Conv2d(channels, channels, 3, padding=1)
        "conv_w": jax.random.normal(kw, (C, C, 3, 3), jnp.float32) * 0.1,
        "conv_b": jax.random.normal(kb, (C,), jnp.float32) * 0.1,
        # nn.BatchNorm2d(channels) — eval mode with running stats
        "bn_w": 1.0 + 0.1 * jax.random.normal(kbw, (C,), jnp.float32),
        "bn_b": 0.1 * jax.random.normal(kbb, (C,), jnp.float32),
        "bn_mean": 0.1 * jax.random.normal(kbm, (C,), jnp.float32),
        "bn_var": 1.0 + 0.1 * jax.random.uniform(kbv, (C,), jnp.float32),
        # gamma: PyTorch inits to 0 (output == x); use 0.5 so the attention
        # path is actually exercised numerically.
        "gamma": jnp.array([0.5], jnp.float32),
    }

    out = jax.block_until_ready(texture_attention_forward(x, params))
    ref = jax.block_until_ready(reference_forward(x, params))

    max_err = float(jnp.max(jnp.abs(out - ref)))
    assert out.shape == (B, C, H, W)
    # Default MXU precision (bf16 passes, same as the XLA reference) plus the
    # EUP approximate reciprocal -> keep a slightly relaxed tolerance.
    # (Pass precision=lax.Precision.HIGHEST in the dots for tighter accuracy.)
    assert max_err < 2e-3, f"mismatch vs reference: {max_err}"

    print("KERNEL_OK")
</pallas_src>

<mosaic_0001>
module attributes {stable_mosaic.version = 11 : i64} {
  func.func @fused_texture_attention_kernel(%arg0: i32, %arg1: memref<1x36x256xf32, #tpu.memory_space<vmem>>, %arg2: memref<4x36xf32, #tpu.memory_space<vmem>>, %arg3: memref<4x1xf32, #tpu.memory_space<vmem>>, %arg4: memref<1x1xf32, #tpu.memory_space<smem>>, %arg5: memref<1x4x256xf32, #tpu.memory_space<vmem>>) attributes {dimension_semantics = [#tpu.dimension_semantics<parallel>], iteration_bounds = array<i64: 2>, scalar_prefetch = 0 : i64, scratch_operands = 0 : i64, tpu.core_type = #tpu.core_type<tc>, window_params = [{transform_indices = @transform_0, window_bounds = array<i64: 1, 36, 256>}, {pipeline_mode = #tpu.pipeline_mode<synchronous>, transform_indices = @transform_1, window_bounds = array<i64: 4, 36>}, {pipeline_mode = #tpu.pipeline_mode<synchronous>, transform_indices = @transform_2, window_bounds = array<i64: 4, 1>}, {transform_indices = @transform_3, window_bounds = array<i64: 1, 1>}, {transform_indices = @transform_4, window_bounds = array<i64: 1, 4, 256>}]} {
    %c0 = arith.constant 0 : index
    %c0_0 = arith.constant 0 : index
    %0 = vector.load %arg2[%c0, %c0_0] : memref<4x36xf32, #tpu.memory_space<vmem>>, vector<4x36xf32>
    %c0_1 = arith.constant 0 : index
    %c0_2 = arith.constant 0 : index
    %c0_3 = arith.constant 0 : index
    %1 = vector.load %arg1[%c0_1, %c0_2, %c0_3] : memref<1x36x256xf32, #tpu.memory_space<vmem>>, vector<1x36x256xf32>
    %2 = vector.shape_cast %1 : vector<1x36x256xf32> to vector<36x256xf32>
    %cst = arith.constant dense<0.000000e+00> : vector<4x256xf32>
    %3 = tpu.matmul %0, %2, %cst {dimension_numbers = #tpu.dot_dimension_numbers<[1], [0], [0], [1], [0, 0, 1, 1], [], []>} : vector<4x36xf32>, vector<36x256xf32>, vector<4x256xf32> -> vector<4x256xf32>
    %c0_4 = arith.constant 0 : index
    %c0_5 = arith.constant 0 : index
    %4 = vector.load %arg3[%c0_4, %c0_5] : memref<4x1xf32, #tpu.memory_space<vmem>>, vector<4x1xf32>
    %5 = vector.broadcast %4 : vector<4x1xf32> to vector<4x256xf32>
    %6 = arith.addf %3, %5 : vector<4x256xf32>
    %cst_6 = arith.constant 0.000000e+00 : f32
    %7 = vector.broadcast %cst_6 : f32 to vector<4x256xf32>
    %8 = arith.maximumf %6, %7 : vector<4x256xf32>
    %9 = arith.mulf %8, %8 : vector<4x256xf32>
    %cst_7 = arith.constant dense<0.000000e+00> : vector<256xf32>
    %10 = vector.multi_reduction <add>, %9, %cst_7 [0] : vector<4x256xf32> to vector<256xf32>
    %11 = vector.shape_cast %10 : vector<256xf32> to vector<1x256xf32>
    %cst_8 = arith.constant 1.000000e-24 : f32
    %12 = vector.broadcast %cst_8 : f32 to vector<1x256xf32>
    %13 = arith.maximumf %11, %12 : vector<1x256xf32>
    %14 = math.rsqrt %13 : vector<1x256xf32>
    %cst_9 = arith.constant 1.41421354 : f32
    %15 = vector.broadcast %cst_9 : f32 to vector<1x256xf32>
    %16 = arith.mulf %15, %14 : vector<1x256xf32>
    %17 = vector.broadcast %16 : vector<1x256xf32> to vector<4x256xf32>
    %18 = arith.mulf %8, %17 : vector<4x256xf32>
    %19 = tpu.transpose %18, [1, 0] : vector<4x256xf32> -> vector<256x4xf32>
    %cst_10 = arith.constant dense<0.000000e+00> : vector<256x256xf32>
    %20 = tpu.matmul %19, %18, %cst_10 {dimension_numbers = #tpu.dot_dimension_numbers<[1], [0], [0], [1], [0, 0, 1, 1], [], []>} : vector<256x4xf32>, vector<4x256xf32>, vector<256x256xf32> -> vector<256x256xf32>
    %cst_11 = arith.constant dense<0xFF800000> : vector<256xf32>
    %21 = vector.multi_reduction <maximumf>, %20, %cst_11 [0] : vector<256x256xf32> to vector<256xf32>
    %22 = vector.shape_cast %21 : vector<256xf32> to vector<1x256xf32>
    %23 = vector.broadcast %22 : vector<1x256xf32> to vector<256x256xf32>
    %24 = arith.subf %20, %23 : vector<256x256xf32>
    %25 = math.exp %24 : vector<256x256xf32>
    %cst_12 = arith.constant dense<0.000000e+00> : vector<256xf32>
    %26 = vector.multi_reduction <add>, %25, %cst_12 [0] : vector<256x256xf32> to vector<256xf32>
    %27 = vector.shape_cast %26 : vector<256xf32> to vector<1x256xf32>
    %28 = tpu.reciprocal %27 {approx = true} : vector<1x256xf32> -> vector<1x256xf32>
    %c0_13 = arith.constant 0 : index
    %c16 = arith.constant 16 : index
    %c0_14 = arith.constant 0 : index
    %29 = vector.load %arg1[%c0_13, %c16, %c0_14] : memref<1x36x256xf32, #tpu.memory_space<vmem>>, vector<1x4x256xf32>
    %30 = vector.shape_cast %29 : vector<1x4x256xf32> to vector<4x256xf32>
    %cst_15 = arith.constant dense<0.000000e+00> : vector<4x256xf32>
    %31 = tpu.matmul %30, %25, %cst_15 {dimension_numbers = #tpu.dot_dimension_numbers<[1], [0], [0], [1], [0, 0, 1, 1], [], []>} : vector<4x256xf32>, vector<256x256xf32>, vector<4x256xf32> -> vector<4x256xf32>
    %32 = vector.broadcast %28 : vector<1x256xf32> to vector<4x256xf32>
    %33 = arith.mulf %31, %32 : vector<4x256xf32>
    %c0_16 = arith.constant 0 : index
    %c0_17 = arith.constant 0 : index
    %34 = memref.load %arg4[%c0_16, %c0_17] : memref<1x1xf32, #tpu.memory_space<smem>>
    %35 = vector.broadcast %34 : f32 to vector<4x256xf32>
    %36 = arith.mulf %35, %33 : vector<4x256xf32>
    %37 = arith.addf %30, %36 : vector<4x256xf32>
    %c0_18 = arith.constant 0 : index
    %c0_19 = arith.constant 0 : index
    %c0_20 = arith.constant 0 : index
    %38 = vector.load %arg5[%c0_18, %c0_19, %c0_20] : memref<1x4x256xf32, #tpu.memory_space<vmem>>, vector<1x4x256xf32>
    %39 = vector.shape_cast %38 : vector<1x4x256xf32> to vector<4x256xf32>
    %40 = vector.shape_cast %37 : vector<4x256xf32> to vector<1x4x256xf32>
    tpu.vector_store %arg5[%c0_18, %c0_19, %c0_20], %40 {strides = array<i32>} : memref<1x4x256xf32, #tpu.memory_space<vmem>>, vector<1x4x256xf32>,
    return
  }
  func.func @transform_0(%arg0: i32) -> (i32, i32, i32) {
    %c0_i32 = arith.constant 0 : i32
    %c0_i32_0 = arith.constant 0 : i32
    %c0_i32_1 = arith.constant 0 : i32
    return %arg0, %c0_i32, %c0_i32_0 : i32, i32, i32
  }
  func.func @transform_1(%arg0: i32) -> (i32, i32) {
    %c0_i32 = arith.constant 0 : i32
    %c0_i32_0 = arith.constant 0 : i32
    %c0_i32_1 = arith.constant 0 : i32
    return %c0_i32, %c0_i32_0 : i32, i32
  }
  func.func @transform_2(%arg0: i32) -> (i32, i32) {
    %c0_i32 = arith.constant 0 : i32
    %c0_i32_0 = arith.constant 0 : i32
    %c0_i32_1 = arith.constant 0 : i32
    return %c0_i32, %c0_i32_0 : i32, i32
  }
  func.func @transform_3(%arg0: i32) -> (i32, i32) {
    %c0_i32 = arith.constant 0 : i32
    %c0_i32_0 = arith.constant 0 : i32
    %c0_i32_1 = arith.constant 0 : i32
    return %c0_i32, %c0_i32_0 : i32, i32
  }
  func.func @transform_4(%arg0: i32) -> (i32, i32, i32) {
    %c0_i32 = arith.constant 0 : i32
    %c0_i32_0 = arith.constant 0 : i32
    %c0_i32_1 = arith.constant 0 : i32
    return %arg0, %c0_i32, %c0_i32_0 : i32, i32, i32
  }
}

</mosaic_0001>

<llo_original>
// kernel: texture_attention_forward.1
$region0: #{texture_attention_forward.1}
  #allocation0 [shape = 'u32[]', space=smem, size = 0x4, offset = 0x4, fixed_abs, tag = 'smem constant byte address 0x4 - core index']
  #allocation1 [shape = 'u32[144,128]{1,0:T(1,128)}', space=vmem, size = 0x12000, scoped, tag = 'internal scratch']
  #allocation2 [shape = 'f32[1,1]{1,0:T(1,128)S(6)}', space=smem, size = 0x200, scoped, tag = 'scoped memory for texture_attention_forward.1']
  %s0 = inlined_call_operand.vmem [shape: f32[2,36,256], index: 0, kind: input, shape index: {}]
  %s1 = inlined_call_operand.vmem [shape: f32[4,36], index: 1, kind: input, shape index: {}]
  %s2 = inlined_call_operand.vmem [shape: f32[4,1], index: 2, kind: input, shape index: {}]
  %s3 = inlined_call_operand.<no memory space> [shape: f32[1,1], index: 3, kind: input, shape index: {}]
  %s4 = inlined_call_operand.vmem [shape: f32[2,4,256], index: 4, kind: output, shape index: {}]
  %s5 = sld [smem:[#allocation0]]
  $region49: #{texture_attention_forward.1} parent=0
    _
  %s7 = ssub.s32 1, %s5
  %s8 = scalar_select 0, %s7, %s5
  %9 = sst [smem:[#allocation2]] %s3
  loop: start=0, step=1, limit=4
  $region2: #{texture_attention_forward.1} parent=0 // loop_pre_header
    _
  $region3: #{texture_attention_forward.1} parent=0 // loop_header
    %s11 = sphi 0, %s15
    %p12 = scmp.ge.s32.totalorder %s11, 4
    %s21 = sphi 0, %s23
    %s24 = sphi 0, %s21
    %s25 = sphi 0, %s24
    %s41 = sphi 0, %s25
    %s45 = sphi 0, %s45
    %s47 = sphi 0, %s45
    %s48 = sphi 0, %s47
    %s62 = sphi 0, %s48
    %s66 = sphi 0, %s66
    %s68 = sphi 0, %s66
    %s69 = sphi 0, %s68
    %s83 = sphi 0, %s69
    %s87 = sphi 0, %s87
    %s89 = sphi 0, %s87
    %s90 = sphi 0, %s89
    %s104 = sphi 0, %s90
    %s110 = sphi 0, %s112
    %s113 = sphi 0, %s110
    %s114 = sphi 0, %s113
    %s130 = sphi 0, %s114
  $region4: #{texture_attention_forward.1} parent=0 // loop_header_branch
    %14 = sbr.rel (%p12) target = $region8
  $region5: #{texture_attention_forward.1} parent=0 // loop_body
    %s16 = ssub.s32 %s11, 1
    %s17 = ssub.s32 %s11, 2
    %s18 = sadd.s32 %s11, 1
    %s19 = ssub.s32 %s11, %s18
    %p20 = scmp.eq.s32.totalorder %s19, 0
    %s22 = sadd.s32 %s21, 1
    %s23 = scalar_select %p20, %s21, %s22
    %p26 = pneg %p20
    %p27 = scmp.eq.s32.totalorder %s11, 1
    %p28 = por %p26, %p27
    %p29 = scmp.ne.s32.totalorder %s21, %s24
    %p30 = scmp.eq.s32.totalorder %s11, 0
    %p31 = por %p29, %p30
    %p32 = scmp.ne.s32.totalorder %s21, %s24
    %p33 = scmp.eq.s32.totalorder %s16, 1
    %p34 = por %p32, %p33
    %p35 = scmp.ne.s32.totalorder %s24, %s25
    %p36 = scmp.eq.s32.totalorder %s16, 0
    %p37 = por %p35, %p36
    %p38 = scmp.ne.s32.totalorder %s24, %s25
    %p39 = scmp.eq.s32.totalorder %s17, 1
    %p40 = por %p38, %p39
    %p42 = scmp.ne.s32.totalorder %s25, %s41
    %p43 = scmp.eq.s32.totalorder %s17, 0
    %p44 = por %p42, %p43
    %s46 = sadd.s32 %s45, 1
    %p49 = scmp.eq.s32.totalorder %s11, 1
    %p50 = scmp.ne.s32.totalorder %s45, %s47
    %p51 = scmp.eq.s32.totalorder %s11, 0
    %p52 = por %p50, %p51
    %p53 = scmp.ne.s32.totalorder %s45, %s47
    %p54 = scmp.eq.s32.totalorder %s16, 1
    %p55 = por %p53, %p54
    %p56 = scmp.ne.s32.totalorder %s47, %s48
    %p57 = scmp.eq.s32.totalorder %s16, 0
    %p58 = por %p56, %p57
    %p59 = scmp.ne.s32.totalorder %s47, %s48
    %p60 = scmp.eq.s32.totalorder %s17, 1
    %p61 = por %p59, %p60
    %p63 = scmp.ne.s32.totalorder %s48, %s62
    %p64 = scmp.eq.s32.totalorder %s17, 0
    %p65 = por %p63, %p64
    %s67 = sadd.s32 %s66, 1
    %p70 = scmp.eq.s32.totalorder %s11, 1
    %p71 = scmp.ne.s32.totalorder %s66, %s68
    %p72 = scmp.eq.s32.totalorder %s11, 0
    %p73 = por %p71, %p72
    %p74 = scmp.ne.s32.totalorder %s66, %s68
    %p75 = scmp.eq.s32.totalorder %s16, 1
    %p76 = por %p74, %p75
    %p77 = scmp.ne.s32.totalorder %s68, %s69
    %p78 = scmp.eq.s32.totalorder %s16, 0
    %p79 = por %p77, %p78
    %p80 = scmp.ne.s32.totalorder %s68, %s69
    %p81 = scmp.eq.s32.totalorder %s17, 1
    %p82 = por %p80, %p81
    %p84 = scmp.ne.s32.totalorder %s69, %s83
    %p85 = scmp.eq.s32.totalorder %s17, 0
    %p86 = por %p84, %p85
    %s88 = sadd.s32 %s87, 1
    %p91 = scmp.eq.s32.totalorder %s11, 1
    %p92 = scmp.ne.s32.totalorder %s87, %s89
    %p93 = scmp.eq.s32.totalorder %s11, 0
    %p94 = por %p92, %p93
    %p95 = scmp.ne.s32.totalorder %s87, %s89
    %p96 = scmp.eq.s32.totalorder %s16, 1
    %p97 = por %p95, %p96
    %p98 = scmp.ne.s32.totalorder %s89, %s90
    %p99 = scmp.eq.s32.totalorder %s16, 0
    %p100 = por %p98, %p99
    %p101 = scmp.ne.s32.totalorder %s89, %s90
    %p102 = scmp.eq.s32.totalorder %s17, 1
    %p103 = por %p101, %p102
    %p105 = scmp.ne.s32.totalorder %s90, %s104
    %p106 = scmp.eq.s32.totalorder %s17, 0
    %p107 = por %p105, %p106
    %s108 = ssub.s32 %s11, %s18
    %p109 = scmp.eq.s32.totalorder %s108, 0
    %s111 = sadd.s32 %s110, 1
    %s112 = scalar_select %p109, %s110, %s111
    %p115 = pneg %p109
    %p116 = scmp.eq.s32.totalorder %s11, 1
    %p117 = por %p115, %p116
    %p118 = scmp.ne.s32.totalorder %s110, %s113
    %p119 = scmp.eq.s32.totalorder %s11, 0
    %p120 = por %p118, %p119
    %p121 = scmp.ne.s32.totalorder %s110, %s113
    %p122 = scmp.eq.s32.totalorder %s16, 1
    %p123 = por %p121, %p122
    %p124 = scmp.ne.s32.totalorder %s113, %s114
    %p125 = scmp.eq.s32.totalorder %s16, 0
    %p126 = por %p124, %p125
    %p127 = scmp.ne.s32.totalorder %s113, %s114
    %p128 = scmp.eq.s32.totalorder %s17, 1
    %p129 = por %p127, %p128
    %p131 = scmp.ne.s32.totalorder %s114, %s130
    %p132 = scmp.eq.s32.totalorder %s17, 0
    %p133 = por %p131, %p132
    %p134 = scmp.le.s32.totalorder 1, %s11
    %p135 = scmp.lt.s32.totalorder %s11, 3
    %p136 = pnand %p134, %p135
    %p137 = pneg %p136
    // Predicated region
    $region9: #{texture_attention_forward.1} parent=5 // pred_check
      _
    $region10: #{texture_attention_forward.1} parent=5 // pred_check_branch
      %139 = sbr.rel (%p136) target = $region12
    $region11: #{texture_attention_forward.1} parent=5 // pred_region
      %s140 = ssub.s32 %s11, 1
      // Predicated region
      $region13: #{texture_attention_forward.1} parent=11 // pred_check
        %p141 = pneg %p58
      $region14: #{texture_attention_forward.1} parent=11 // pred_check_branch
        %143 = sbr.rel (%p141) target = $region16
      $region15: #{texture_attention_forward.1} parent=11 // pred_region
        _
      $region16: #{texture_attention_forward.1} parent=11 // pred_fallthru
        _
      // Predicated region
      $region17: #{texture_attention_forward.1} parent=11 // pred_check
        %p144 = pneg %p79
      $region18: #{texture_attention_forward.1} parent=11 // pred_check_branch
        %146 = sbr.rel (%p144) target = $region20
      $region19: #{texture_attention_forward.1} parent=11 // pred_region
        _
      $region20: #{texture_attention_forward.1} parent=11 // pred_fallthru
        _
      // Predicated region
      $region21: #{texture_attention_forward.1} parent=11 // pred_check
        %p147 = pneg %p100
      $region22: #{texture_attention_forward.1} parent=11 // pred_check_branch
        %149 = sbr.rel (%p147) target = $region24
      $region23: #{texture_attention_forward.1} parent=11 // pred_region
        _
      $region24: #{texture_attention_forward.1} parent=11 // pred_fallthru
        _
    $region12: #{texture_attention_forward.1} parent=5 // pred_fallthru
      _
    %p150 = scmp.lt.s32.totalorder %s11, 2
    // Predicated region
    $region25: #{texture_attention_forward.1} parent=5 // pred_check
      %p151 = pneg %p150
    $region26: #{texture_attention_forward.1} parent=5 // pred_check_branch
      %153 = sbr.rel (%p151) target = $region28
    $region27: #{texture_attention_forward.1} parent=5 // pred_region
      // Predicated region
      $region29: #{texture_attention_forward.1} parent=27 // pred_check
        %p154 = pneg %p31
      $region30: #{texture_attention_forward.1} parent=27 // pred_check_branch
        %156 = sbr.rel (%p154) target = $region32
      $region31: #{texture_attention_forward.1} parent=27 // pred_region
        %p157 = scmp.lt.s32.totalorder %s11, 1
        %s158 = scalar_select %p157, %s11, 1
        %s159 = smul.addr %s158, 10
        %s160 = smul.addr %s159, 8
        %s161 = scalar_lea.vmem %s0, %s160
      $region32: #{texture_attention_forward.1} parent=27 // pred_fallthru
        _
    $region28: #{texture_attention_forward.1} parent=5 // pred_fallthru
      _
    %p162 = scmp.le.s32.totalorder 1, %s11
    %p163 = scmp.lt.s32.totalorder %s11, 3
    %p164 = pnand %p162, %p163
    %p165 = pneg %p164
    // Predicated region
    $region33: #{texture_attention_forward.1} parent=5 // pred_check
      _
    $region34: #{texture_attention_forward.1} parent=5 // pred_check_branch
      %167 = sbr.rel (%p164) target = $region36
    $region35: #{texture_attention_forward.1} parent=5 // pred_region
      %s168 = ssub.s32 %s11, 1
      %p169 = scmp.lt.s32.totalorder %s16, 1
      %s170 = scalar_select %p169, %s16, 1
      %s171 = smul.addr %s170, 10
      %s172 = smul.addr %s171, 8
      %s173 = scalar_lea.vmem %s0, %s172
      %p174 = pneg %p37
      %p175 = pneg %p34
      %p176 = pneg %p58
      %p177 = pneg %p55
      %p178 = pneg %p79
      %p179 = pneg %p76
      %p180 = pneg %p100
      %p181 = pneg %p97
      %p182 = pneg %p126
      %p183 = pneg %p123
      %p184 = scmp.lt.s32.totalorder %s16, 1
      %s185 = scalar_select %p184, %s16, 1
      %s186 = smul.addr %s185, 2
      %s187 = smul.addr %s186, 4
      %s188 = scalar_lea.vmem %s4, %s187
      %p189 = scmp.lt.s32.totalorder %s16, 1
      %s190 = scalar_select %p189, %s16, 1
      %s191 = smul.addr %s190, 10
      %s192 = smul.addr %s191, 8
      %s193 = scalar_lea.vmem %s0, %s192
      %p194 = scmp.lt.s32.totalorder %s16, 1
      %s195 = scalar_select %p194, %s16, 1
      %s196 = smul.addr %s195, 2
      %s197 = smul.addr %s196, 4
      %s198 = scalar_lea.vmem %s4, %s197
      %v199 = vld [vmem:[%s1] sm:$0xf]
      %v200 = vld [vmem:[%s193] sm:$0xff]
      %v201 = vld [vmem:[%s193 + $0x8] sm:$0xff]
      %v202 = vld [vmem:[%s193 + $0x10] sm:$0xff]
      %v203 = vld [vmem:[%s193 + $0x18] sm:$0xff]
      %v204 = vld [vmem:[%s193 + $0x20] sm:$0xff]
      %v205 = vld [vmem:[%s193 + $0x28] sm:$0xff]
      %v206 = vld [vmem:[%s193 + $0x30] sm:$0xff]
      %v207 = vld [vmem:[%s193 + $0x38] sm:$0xff]
      %v208 = vld [vmem:[%s193 + $0x40] sm:$0xf]
      %v209 = vld [vmem:[%s193 + $0x48] sm:$0xf]
      %v210 = vld [vmem:[%s2] sm:$0xf]
      %212 = vset.pattern.permute.xlu0 0
      %213 = vperm.xlu0 %212, %v210
      %v214 = vpop.permute.xlu0 %213
      %vm216 = vcmask 293888
      %v218 = vsel %vm216, %v199, 0
      %vm220 = vcmask 1043456
      %v222 = vsel %vm220, %v208, 0
      %v225 = vsel %vm220, %v209, 0
      %227 = vmatprep.subr.mxu0 0.0
      %228 = vmatpush1.msra.mxu0 0.0
      %229 = vmatprep.subr.mxu0 0.0
      %230 = vmatpush1.msra.mxu0 0.0
      %231 = vmatprep.subr.mxu0 0.0
      %232 = vmatpush1.msra.mxu0 0.0
      %233 = vmatprep.subr.mxu0 0.0
      %234 = vmatpush1.msra.mxu0 0.0
      %235 = vmatprep.subr.mxu0 0.0
      %236 = vmatpush1.msra.mxu0 0.0
      %237 = vmatprep.subr.mxu0 0.0
      %238 = vmatpush1.msra.mxu0 0.0
      %239 = vmatprep.subr.mxu0 0.0
      %240 = vmatpush1.msra.mxu0 0.0
      %241 = vmatprep.subr.mxu0 0.0
      %242 = vmatpush1.msra.mxu0 0.0
      %243 = vmatprep.subr.mxu0 0.0
      %244 = vmatpush1.msra.mxu0 0.0
      %245 = vmatprep.subr.mxu0 0.0
      %246 = vmatpush1.msra.mxu0 0.0
      %247 = vmatprep.subr.mxu0 0.0
      %248 = vmatpush1.msra.mxu0 0.0
      %249 = vmatprep.subr.mxu0 %v225
      %250 = vmatpush1.msra.mxu0 %v222
      %251 = vmatprep.subr.mxu0 %v207
      %252 = vmatpush1.msra.mxu0 %v206
      %253 = vmatprep.subr.mxu0 %v205
      %254 = vmatpush1.msra.mxu0 %v204
      %255 = vmatprep.subr.mxu0 %v203
      %256 = vmatpush1.msra.mxu0 %v202
      %257 = vmatprep.subr.mxu0 %v201
      %258 = vmatpush1.msra.mxu0 %v200
      %259 = vmatprep.subr.mxu0 0.0
      %260 = vmatpush2.msra.mxu0 0.0
      %261 = vmatprep.subr.mxu0 0.0
      %262 = vmatpush2.msra.mxu0 0.0
      %263 = vmatprep.subr.mxu0 0.0
      %264 = vmatpush2.msra.mxu0 0.0
      %265 = vmatprep.subr.mxu0 0.0
      %266 = vmatpush2.msra.mxu0 0.0
      %267 = vmatprep.subr.mxu0 0.0
      %268 = vmatpush2.msra.mxu0 0.0
      %269 = vmatprep.subr.mxu0 0.0
      %270 = vmatpush2.msra.mxu0 0.0
      %271 = vmatprep.subr.mxu0 0.0
      %272 = vmatpush2.msra.mxu0 0.0
      %273 = vmatprep.subr.mxu0 0.0
      %274 = vmatpush2.msra.mxu0 0.0
      %275 = vmatprep.subr.mxu0 0.0
      %276 = vmatpush2.msra.mxu0 0.0
      %277 = vmatprep.subr.mxu0 0.0
      %278 = vmatpush2.msra.mxu0 0.0
      %279 = vmatprep.subr.mxu0 0.0
      %280 = vmatpush2.msra.mxu0 0.0
      %281 = vmatprep.subr.mxu0 0.0
      %282 = vmatpush2.msra.mxu0 0.0
      %283 = vmatprep.subr.mxu0 0.0
      %284 = vmatpush2.msra.mxu0 0.0
      %285 = vmatprep.subr.mxu0 0.0
      %286 = vmatpush2.msra.mxu0 0.0
      %287 = vmatprep.subr.mxu0 0.0
      %288 = vmatpush2.msra.mxu0 0.0
      %289 = vmatprep.subr.mxu0 0.0
      %290 = vmatpush2.msra.mxu0 0.0
      %291 = vmatprep.mubr.f32.mxu0 0.0
      %292 = vmatmul.mubr.f32.gmra.mxu0 %v218
      %v293 = vpop.f32.mrf.mxu0
      %v294 = vadd.f32 %v214, %v293
      %v295 = vpop.f32.mrf.mxu0
      %v296 = vadd.f32 %v214, %v295
      %297 = vdwg.mxu0
      %v298 = vmax.f32 %v294, 0.0
      %v299 = vmax.f32 %v296, 0.0
      %v300 = vmul.f32 %v298, %v298
      %v301 = vmul.f32 %v299, %v299
      %v302 = vsel %vm220, %v300, 0.0
      %v303 = vrot.slane %v302, 4
      %v304 = vadd.f32 %v302, %v303
      %v305 = vrot.slane %v304, 2
      %v306 = vadd.f32 %v304, %v305
      %v307 = vrot.slane %v306, 1
      %v308 = vadd.f32 %v306, %v307
      %v309 = vsel %vm220, %v301, 0.0
      %v310 = vrot.slane %v309, 4
      %v311 = vadd.f32 %v309, %v310
      %v312 = vrot.slane %v311, 2
      %v313 = vadd.f32 %v311, %v312
      %v314 = vrot.slane %v313, 1
      %v315 = vadd.f32 %v313, %v314
      %v316 = vmax.f32 %v308, 1e-24
      %v317 = vmax.f32 %v315, 1e-24
      %v318 = vrsqrt.pop %v316
      %v319 = vrsqrt.pop %v317
      %v320 = vmul.f32 %v318, 1.4142135
      %v321 = vmul.f32 %v319, 1.4142135
      %v322 = vmul.f32 %v298, %v320
      %v323 = vmul.f32 %v299, %v321
      %324 = vxpose.xlu0.b32.start [1/16] %v322, 128
      %325 = vxpose.xlu0.b32.cont [2/16] 0.0, 128
      %326 = vxpose.xlu0.b32.cont [3/16] 0.0, 128
      %327 = vxpose.xlu0.b32.cont [4/16] 0.0, 128
      %328 = vxpose.xlu0.b32.cont [5/16] 0.0, 128
      %329 = vxpose.xlu0.b32.cont [6/16] 0.0, 128
      %330 = vxpose.xlu0.b32.cont [7/16] 0.0, 128
      %331 = vxpose.xlu0.b32.cont [8/16] 0.0, 128
      %332 = vxpose.xlu0.b32.cont [9/16] 0.0, 128
      %333 = vxpose.xlu0.b32.cont [10/16] 0.0, 128
      %334 = vxpose.xlu0.b32.cont [11/16] 0.0, 128
      %335 = vxpose.xlu0.b32.cont [12/16] 0.0, 128
      %336 = vxpose.xlu0.b32.cont [13/16] 0.0, 128
      %337 = vxpose.xlu0.b32.cont [14/16] 0.0, 128
      %338 = vxpose.xlu0.b32.cont [15/16] 0.0, 128
      %339 = vxpose.xlu0.b32.end [16/16] 0.0, 128
      %v340 = vpop.trf.xlu0
      %v341 = vpop.trf.xlu0
      %v342 = vpop.trf.xlu0
      %v343 = vpop.trf.xlu0
      %v344 = vpop.trf.xlu0
      %v345 = vpop.trf.xlu0
      %v346 = vpop.trf.xlu0
      %v347 = vpop.trf.xlu0
      %v348 = vpop.trf.xlu0
      %v349 = vpop.trf.xlu0
      %v350 = vpop.trf.xlu0
      %v351 = vpop.trf.xlu0
      %v352 = vpop.trf.xlu0
      %v353 = vpop.trf.xlu0
      %v354 = vpop.trf.xlu0
      %v355 = vpop.trf.xlu0
      %356 = vxpose.xlu0.b32.start [1/16] %v323, 128
      %357 = vxpose.xlu0.b32.cont [2/16] 0.0, 128
      %358 = vxpose.xlu0.b32.cont [3/16] 0.0, 128
      %359 = vxpose.xlu0.b32.cont [4/16] 0.0, 128
      %360 = vxpose.xlu0.b32.cont [5/16] 0.0, 128
      %361 = vxpose.xlu0.b32.cont [6/16] 0.0, 128
      %362 = vxpose.xlu0.b32.cont [7/16] 0.0, 128
      %363 = vxpose.xlu0.b32.cont [8/16] 0.0, 128
      %364 = vxpose.xlu0.b32.cont [9/16] 0.0, 128
      %365 = vxpose.xlu0.b32.cont [10/16] 0.0, 128
      %366 = vxpose.xlu0.b32.cont [11/16] 0.0, 128
      %367 = vxpose.xlu0.b32.cont [12/16] 0.0, 128
      %368 = vxpose.xlu0.b32.cont [13/16] 0.0, 128
      %369 = vxpose.xlu0.b32.cont [14/16] 0.0, 128
      %370 = vxpose.xlu0.b32.cont [15/16] 0.0, 128
      %371 = vxpose.xlu0.b32.end [16/16] 0.0, 128
      %v372 = vpop.trf.xlu0
      %v373 = vpop.trf.xlu0
      %v374 = vpop.trf.xlu0
      %v375 = vpop.trf.xlu0
      %v376 = vpop.trf.xlu0
      %v377 = vpop.trf.xlu0
      %v378 = vpop.trf.xlu0
      %v379 = vpop.trf.xlu0
      %v380 = vpop.trf.xlu0
      %v381 = vpop.trf.xlu0
      %v382 = vpop.trf.xlu0
      %v383 = vpop.trf.xlu0
      %v384 = vpop.trf.xlu0
      %v385 = vpop.trf.xlu0
      %v386 = vpop.trf.xlu0
      %v387 = vpop.trf.xlu0
      %vm388 = vcmask 31744
      %v390 = vsel %vm388, %v340, 0
      %v393 = vsel %vm388, %v341, 0
      %v396 = vsel %vm388, %v342, 0
      %v399 = vsel %vm388, %v343, 0
      %v402 = vsel %vm388, %v344, 0
      %v405 = vsel %vm388, %v345, 0
      %v408 = vsel %vm388, %v346, 0
      %v411 = vsel %vm388, %v347, 0
      %v414 = vsel %vm388, %v348, 0
      %v417 = vsel %vm388, %v349, 0
      %v420 = vsel %vm388, %v350, 0
      %v423 = vsel %vm388, %v351, 0
      %v426 = vsel %vm388, %v352, 0
      %v429 = vsel %vm388, %v353, 0
      %v432 = vsel %vm388, %v354, 0
      %v435 = vsel %vm388, %v355, 0
      %v438 = vsel %vm388, %v372, 0
      %v441 = vsel %vm388, %v373, 0
      %v444 = vsel %vm388, %v374, 0
      %v447 = vsel %vm388, %v375, 0
      %v450 = vsel %vm388, %v376, 0
      %v453 = vsel %vm388, %v377, 0
      %v456 = vsel %vm388, %v378, 0
      %v459 = vsel %vm388, %v379, 0
      %v462 = vsel %vm388, %v380, 0
      %v465 = vsel %vm388, %v381, 0
      %v468 = vsel %vm388, %v382, 0
      %v471 = vsel %vm388, %v383, 0
      %v474 = vsel %vm388, %v384, 0
      %v477 = vsel %vm388, %v385, 0
      %v480 = vsel %vm388, %v386, 0
      %v483 = vsel %vm388, %v387, 0
      %v486 = vsel %vm220, %v322, 0
      %v489 = vsel %vm220, %v323, 0
      %491 = vmatprep.subr.mxu0 0.0
      %492 = vmatpush1.msra.mxu0 0.0
      %493 = vmatprep.subr.mxu0 0.0
      %494 = vmatpush1.msra.mxu0 0.0
      %495 = vmatprep.subr.mxu0 0.0
      %496 = vmatpush1.msra.mxu0 0.0
      %497 = vmatprep.subr.mxu0 0.0
      %498 = vmatpush1.msra.mxu0 0.0
      %499 = vmatprep.subr.mxu0 0.0
      %500 = vmatpush1.msra.mxu0 0.0
      %501 = vmatprep.subr.mxu0 0.0
      %502 = vmatpush1.msra.mxu0 0.0
      %503 = vmatprep.subr.mxu0 0.0
      %504 = vmatpush1.msra.mxu0 0.0
      %505 = vmatprep.subr.mxu0 0.0
      %506 = vmatpush1.msra.mxu0 0.0
      %507 = vmatprep.subr.mxu0 0.0
      %508 = vmatpush1.msra.mxu0 0.0
      %509 = vmatprep.subr.mxu0 0.0
      %510 = vmatpush1.msra.mxu0 0.0
      %511 = vmatprep.subr.mxu0 0.0
      %512 = vmatpush1.msra.mxu0 0.0
      %513 = vmatprep.subr.mxu0 0.0
      %514 = vmatpush1.msra.mxu0 0.0
      %515 = vmatprep.subr.mxu0 0.0
      %516 = vmatpush1.msra.mxu0 0.0
      %517 = vmatprep.subr.mxu0 0.0
      %518 = vmatpush1.msra.mxu0 0.0
      %519 = vmatprep.subr.mxu0 0.0
      %520 = vmatpush1.msra.mxu0 0.0
      %521 = vmatprep.subr.mxu0 %v489
      %522 = vmatpush1.msra.mxu0 %v486
      %523 = vmatprep.subr.mxu0 0.0
      %524 = vmatpush2.msra.mxu0 0.0
      %525 = vmatprep.subr.mxu0 0.0
      %526 = vmatpush2.msra.mxu0 0.0
      %527 = vmatprep.subr.mxu0 0.0
      %528 = vmatpush2.msra.mxu0 0.0
      %529 = vmatprep.subr.mxu0 0.0
      %530 = vmatpush2.msra.mxu0 0.0
      %531 = vmatprep.subr.mxu0 0.0
      %532 = vmatpush2.msra.mxu0 0.0
      %533 = vmatprep.subr.mxu0 0.0
      %534 = vmatpush2.msra.mxu0 0.0
      %535 = vmatprep.subr.mxu0 0.0
      %536 = vmatpush2.msra.mxu0 0.0
      %537 = vmatprep.subr.mxu0 0.0
      %538 = vmatpush2.msra.mxu0 0.0
      %539 = vmatprep.subr.mxu0 0.0
      %540 = vmatpush2.msra.mxu0 0.0
      %541 = vmatprep.subr.mxu0 0.0
      %542 = vmatpush2.msra.mxu0 0.0
      %543 = vmatprep.subr.mxu0 0.0
      %544 = vmatpush2.msra.mxu0 0.0
      %545 = vmatprep.subr.mxu0 0.0
      %546 = vmatpush2.msra.mxu0 0.0
      %547 = vmatprep.subr.mxu0 0.0
      %548 = vmatpush2.msra.mxu0 0.0
      %549 = vmatprep.subr.mxu0 0.0
      %550 = vmatpush2.msra.mxu0 0.0
      %551 = vmatprep.subr.mxu0 0.0
      %552 = vmatpush2.msra.mxu0 0.0
      %553 = vmatprep.subr.mxu0 0.0
      %554 = vmatpush2.msra.mxu0 0.0
      %555 = vmatprep.mubr.f32.mxu0 0.0
      %556 = vmatmul.mubr.f32.gmra.mxu0 %v390
      %v557 = vpop.f32.mrf.mxu0
      %v558 = vadd.f32 0.0, %v557
      %v559 = vpop.f32.mrf.mxu0
      %v560 = vadd.f32 0.0, %v559
      %561 = vmatprep.mubr.f32.mxu0 0.0
      %562 = vmatmul.mubr.f32.gmra.mxu0 %v393
      %v563 = vpop.f32.mrf.mxu0
      %v564 = vadd.f32 0.0, %v563
      %v565 = vpop.f32.mrf.mxu0
      %v566 = vadd.f32 0.0, %v565
      %567 = vmatprep.mubr.f32.mxu0 0.0
      %568 = vmatmul.mubr.f32.gmra.mxu0 %v396
      %v569 = vpop.f32.mrf.mxu0
      %v570 = vadd.f32 0.0, %v569
      %v571 = vpop.f32.mrf.mxu0
      %v572 = vadd.f32 0.0, %v571
      %573 = vmatprep.mubr.f32.mxu0 0.0
      %574 = vmatmul.mubr.f32.gmra.mxu0 %v399
      %v575 = vpop.f32.mrf.mxu0
      %v576 = vadd.f32 0.0, %v575
      %v577 = vpop.f32.mrf.mxu0
      %v578 = vadd.f32 0.0, %v577
      %579 = vmatprep.mubr.f32.mxu0 0.0
      %580 = vmatmul.mubr.f32.gmra.mxu0 %v402
      %v581 = vpop.f32.mrf.mxu0
      %v582 = vadd.f32 0.0, %v581
      %v583 = vpop.f32.mrf.mxu0
      %v584 = vadd.f32 0.0, %v583
      %585 = vmatprep.mubr.f32.mxu0 0.0
      %586 = vmatmul.mubr.f32.gmra.mxu0 %v405
      %v587 = vpop.f32.mrf.mxu0
      %v588 = vadd.f32 0.0, %v587
      %v589 = vpop.f32.mrf.mxu0
      %v590 = vadd.f32 0.0, %v589
      %591 = vmatprep.mubr.f32.mxu0 0.0
      %592 = vmatmul.mubr.f32.gmra.mxu0 %v408
      %v593 = vpop.f32.mrf.mxu0
      %v594 = vadd.f32 0.0, %v593
      %v595 = vpop.f32.mrf.mxu0
      %v596 = vadd.f32 0.0, %v595
      %597 = vmatprep.mubr.f32.mxu0 0.0
      %598 = vmatmul.mubr.f32.gmra.mxu0 %v411
      %v599 = vpop.f32.mrf.mxu0
      %v600 = vadd.f32 0.0, %v599
      %v601 = vpop.f32.mrf.mxu0
      %v602 = vadd.f32 0.0, %v601
      %603 = vmatprep.mubr.f32.mxu0 0.0
      %604 = vmatmul.mubr.f32.gmra.mxu0 %v414
      %v605 = vpop.f32.mrf.mxu0
      %v606 = vadd.f32 0.0, %v605
      %v607 = vpop.f32.mrf.mxu0
      %v608 = vadd.f32 0.0, %v607
      %609 = vmatprep.mubr.f32.mxu0 0.0
      %610 = vmatmul.mubr.f32.gmra.mxu0 %v417
      %v611 = vpop.f32.mrf.mxu0
      %v612 = vadd.f32 0.0, %v611
      %v613 = vpop.f32.mrf.mxu0
      %v614 = vadd.f32 0.0, %v613
      %615 = vmatprep.mubr.f32.mxu0 0.0
      %616 = vmatmul.mubr.f32.gmra.mxu0 %v420
      %v617 = vpop.f32.mrf.mxu0
      %v618 = vadd.f32 0.0, %v617
      %v619 = vpop.f32.mrf.mxu0
      %v620 = vadd.f32 0.0, %v619
      %621 = vmatprep.mubr.f32.mxu0 0.0
      %622 = vmatmul.mubr.f32.gmra.mxu0 %v423
      %v623 = vpop.f32.mrf.mxu0
      %v624 = vadd.f32 0.0, %v623
      %v625 = vpop.f32.mrf.mxu0
      %v626 = vadd.f32 0.0, %v625
      %627 = vmatprep.mubr.f32.mxu0 0.0
      %628 = vmatmul.mubr.f32.gmra.mxu0 %v426
      %v629 = vpop.f32.mrf.mxu0
      %v630 = vadd.f32 0.0, %v629
      %v631 = vpop.f32.mrf.mxu0
      %v632 = vadd.f32 0.0, %v631
      %633 = vmatprep.mubr.f32.mxu0 0.0
      %634 = vmatmul.mubr.f32.gmra.mxu0 %v429
      %v635 = vpop.f32.mrf.mxu0
      %v636 = vadd.f32 0.0, %v635
      %v637 = vpop.f32.mrf.mxu0
      %v638 = vadd.f32 0.0, %v637
      %639 = vmatprep.mubr.f32.mxu0 0.0
      %640 = vmatmul.mubr.f32.gmra.mxu0 %v432
      %v641 = vpop.f32.mrf.mxu0
      %v642 = vadd.f32 0.0, %v641
      %v643 = vpop.f32.mrf.mxu0
      %v644 = vadd.f32 0.0, %v643
      %645 = vmatprep.mubr.f32.mxu0 0.0
      %646 = vmatmul.mubr.f32.gmra.mxu0 %v435
      %v647 = vpop.f32.mrf.mxu0
      %v648 = vadd.f32 0.0, %v647
      %v649 = vpop.f32.mrf.mxu0
      %v650 = vadd.f32 0.0, %v649
      %651 = vmatprep.mubr.f32.mxu0 0.0
      %652 = vmatmul.mubr.f32.gmra.mxu0 %v438
      %v653 = vpop.f32.mrf.mxu0
      %v654 = vadd.f32 0.0, %v653
      %v655 = vpop.f32.mrf.mxu0
      %v656 = vadd.f32 0.0, %v655
      %657 = vmatprep.mubr.f32.mxu0 0.0
      %658 = vmatmul.mubr.f32.gmra.mxu0 %v441
      %v659 = vpop.f32.mrf.mxu0
      %v660 = vadd.f32 0.0, %v659
      %v661 = vpop.f32.mrf.mxu0
      %v662 = vadd.f32 0.0, %v661
      %663 = vmatprep.mubr.f32.mxu0 0.0
      %664 = vmatmul.mubr.f32.gmra.mxu0 %v444
      %v665 = vpop.f32.mrf.mxu0
      %v666 = vadd.f32 0.0, %v665
      %v667 = vpop.f32.mrf.mxu0
      %v668 = vadd.f32 0.0, %v667
      %669 = vmatprep.mubr.f32.mxu0 0.0
      %670 = vmatmul.mubr.f32.gmra.mxu0 %v447
      %v671 = vpop.f32.mrf.mxu0
      %v672 = vadd.f32 0.0, %v671
      %v673 = vpop.f32.mrf.mxu0
      %v674 = vadd.f32 0.0, %v673
      %675 = vmatprep.mubr.f32.mxu0 0.0
      %676 = vmatmul.mubr.f32.gmra.mxu0 %v450
      %v677 = vpop.f32.mrf.mxu0
      %v678 = vadd.f32 0.0, %v677
      %v679 = vpop.f32.mrf.mxu0
      %v680 = vadd.f32 0.0, %v679
      %681 = vmatprep.mubr.f32.mxu0 0.0
      %682 = vmatmul.mubr.f32.gmra.mxu0 %v453
      %v683 = vpop.f32.mrf.mxu0
      %v684 = vadd.f32 0.0, %v683
      %v685 = vpop.f32.mrf.mxu0
      %v686 = vadd.f32 0.0, %v685
      %687 = vmatprep.mubr.f32.mxu0 0.0
      %688 = vmatmul.mubr.f32.gmra.mxu0 %v456
      %v689 = vpop.f32.mrf.mxu0
      %v690 = vadd.f32 0.0, %v689
      %v691 = vpop.f32.mrf.mxu0
      %v692 = vadd.f32 0.0, %v691
      %693 = vmatprep.mubr.f32.mxu0 0.0
      %694 = vmatmul.mubr.f32.gmra.mxu0 %v459
      %v695 = vpop.f32.mrf.mxu0
      %v696 = vadd.f32 0.0, %v695
      %v697 = vpop.f32.mrf.mxu0
      %v698 = vadd.f32 0.0, %v697
      %699 = vmatprep.mubr.f32.mxu0 0.0
      %700 = vmatmul.mubr.f32.gmra.mxu0 %v462
      %v701 = vpop.f32.mrf.mxu0
      %v702 = vadd.f32 0.0, %v701
      %v703 = vpop.f32.mrf.mxu0
      %v704 = vadd.f32 0.0, %v703
      %705 = vmatprep.mubr.f32.mxu0 0.0
      %706 = vmatmul.mubr.f32.gmra.mxu0 %v465
      %v707 = vpop.f32.mrf.mxu0
      %v708 = vadd.f32 0.0, %v707
      %v709 = vpop.f32.mrf.mxu0
      %v710 = vadd.f32 0.0, %v709
      %711 = vmatprep.mubr.f32.mxu0 0.0
      %712 = vmatmul.mubr.f32.gmra.mxu0 %v468
      %v713 = vpop.f32.mrf.mxu0
      %v714 = vadd.f32 0.0, %v713
      %v715 = vpop.f32.mrf.mxu0
      %v716 = vadd.f32 0.0, %v715
      %717 = vmatprep.mubr.f32.mxu0 0.0
      %718 = vmatmul.mubr.f32.gmra.mxu0 %v471
      %v719 = vpop.f32.mrf.mxu0
      %v720 = vadd.f32 0.0, %v719
      %v721 = vpop.f32.mrf.mxu0
      %v722 = vadd.f32 0.0, %v721
      %723 = vmatprep.mubr.f32.mxu0 0.0
      %724 = vmatmul.mubr.f32.gmra.mxu0 %v474
      %v725 = vpop.f32.mrf.mxu0
      %v726 = vadd.f32 0.0, %v725
      %v727 = vpop.f32.mrf.mxu0
      %v728 = vadd.f32 0.0, %v727
      %729 = vmatprep.mubr.f32.mxu0 0.0
      %730 = vmatmul.mubr.f32.gmra.mxu0 %v477
      %v731 = vpop.f32.mrf.mxu0
      %v732 = vadd.f32 0.0, %v731
      %v733 = vpop.f32.mrf.mxu0
      %v734 = vadd.f32 0.0, %v733
      %735 = vmatprep.mubr.f32.mxu0 0.0
      %736 = vmatmul.mubr.f32.gmra.mxu0 %v480
      %v737 = vpop.f32.mrf.mxu0
      %v738 = vadd.f32 0.0, %v737
      %v739 = vpop.f32.mrf.mxu0
      %v740 = vadd.f32 0.0, %v739
      %741 = vmatprep.mubr.f32.mxu0 0.0
      %742 = vmatmul.mubr.f32.gmra.mxu0 %v483
      %v743 = vpop.f32.mrf.mxu0
      %v744 = vadd.f32 0.0, %v743
      %v745 = vpop.f32.mrf.mxu0
      %v746 = vadd.f32 0.0, %v745
      %747 = vdwg.mxu0
      %v748 = vmax.f32 %v558, %v570
      %v749 = vmax.f32 %v564, %v576
      %v750 = vmax.f32 %v748, %v582
      %v751 = vmax.f32 %v749, %v588
      %v752 = vmax.f32 %v750, %v594
      %v753 = vmax.f32 %v751, %v600
      %v754 = vmax.f32 %v752, %v606
      %v755 = vmax.f32 %v753, %v612
      %v756 = vmax.f32 %v754, %v618
      %v757 = vmax.f32 %v755, %v624
      %v758 = vmax.f32 %v756, %v630
      %v759 = vmax.f32 %v757, %v636
      %v760 = vmax.f32 %v758, %v642
      %v761 = vmax.f32 %v759, %v648
      %v762 = vmax.f32 %v760, %v654
      %v763 = vmax.f32 %v761, %v660
      %v764 = vmax.f32 %v762, %v666
      %v765 = vmax.f32 %v763, %v672
      %v766 = vmax.f32 %v764, %v678
      %v767 = vmax.f32 %v765, %v684
      %v768 = vmax.f32 %v766, %v690
      %v769 = vmax.f32 %v767, %v696
      %v770 = vmax.f32 %v768, %v702
      %v771 = vmax.f32 %v769, %v708
      %v772 = vmax.f32 %v770, %v714
      %v773 = vmax.f32 %v771, %v720
      %v774 = vmax.f32 %v772, %v726
      %v775 = vmax.f32 %v773, %v732
      %v776 = vmax.f32 %v774, %v738
      %v777 = vmax.f32 %v775, %v744
      %v778 = vmax.f32 %v776, %v777
      %v779 = vrot.slane %v778, 4
      %v780 = vmax.f32 %v778, %v779
      %v781 = vrot.slane %v780, 2
      %v782 = vmax.f32 %v780, %v781
      %v783 = vrot.slane %v782, 1
      %v784 = vmax.f32 %v782, %v783
      %v785 = vmax.f32 %v560, %v572
      %v786 = vmax.f32 %v566, %v578
      %v787 = vmax.f32 %v785, %v584
      %v788 = vmax.f32 %v786, %v590
      %v789 = vmax.f32 %v787, %v596
      %v790 = vmax.f32 %v788, %v602
      %v791 = vmax.f32 %v789, %v608
      %v792 = vmax.f32 %v790, %v614
      %v793 = vmax.f32 %v791, %v620
      %v794 = vmax.f32 %v792, %v626
      %v795 = vmax.f32 %v793, %v632
      %v796 = vmax.f32 %v794, %v638
      %v797 = vmax.f32 %v795, %v644
      %v798 = vmax.f32 %v796, %v650
      %v799 = vmax.f32 %v797, %v656
      %v800 = vmax.f32 %v798, %v662
      %v801 = vmax.f32 %v799, %v668
      %v802 = vmax.f32 %v800, %v674
      %v803 = vmax.f32 %v801, %v680
      %v804 = vmax.f32 %v802, %v686
      %v805 = vmax.f32 %v803, %v692
      %v806 = vmax.f32 %v804, %v698
      %v807 = vmax.f32 %v805, %v704
      %v808 = vmax.f32 %v806, %v710
      %v809 = vmax.f32 %v807, %v716
      %v810 = vmax.f32 %v808, %v722
      %v811 = vmax.f32 %v809, %v728
      %v812 = vmax.f32 %v810, %v734
      %v813 = vmax.f32 %v811, %v740
      %v814 = vmax.f32 %v812, %v746
      %v815 = vmax.f32 %v813, %v814
      %v816 = vrot.slane %v815, 4
      %v817 = vmax.f32 %v815, %v816
      %v818 = vrot.slane %v817, 2
      %v819 = vmax.f32 %v817, %v818
      %v820 = vrot.slane %v819, 1
      %v821 = vmax.f32 %v819, %v820
      %v822 = vsub.f32 %v558, %v784
      %v823 = vsub.f32 %v560, %v821
      %v824 = vsub.f32 %v564, %v784
      %v825 = vsub.f32 %v566, %v821
      %v826 = vsub.f32 %v570, %v784
      %v827 = vsub.f32 %v572, %v821
      %v828 = vsub.f32 %v576, %v784
      %v829 = vsub.f32 %v578, %v821
      %v830 = vsub.f32 %v582, %v784
      %v831 = vsub.f32 %v584, %v821
      %v832 = vsub.f32 %v588, %v784
      %v833 = vsub.f32 %v590, %v821
      %v834 = vsub.f32 %v594, %v784
      %v835 = vsub.f32 %v596, %v821
      %v836 = vsub.f32 %v600, %v784
      %v837 = vsub.f32 %v602, %v821
      %v838 = vsub.f32 %v606, %v784
      %v839 = vsub.f32 %v608, %v821
      %v840 = vsub.f32 %v612, %v784
      %v841 = vsub.f32 %v614, %v821
      %v842 = vsub.f32 %v618, %v784
      %v843 = vsub.f32 %v620, %v821
      %v844 = vsub.f32 %v624, %v784
      %v845 = vsub.f32 %v626, %v821
      %v846 = vsub.f32 %v630, %v784
      %v847 = vsub.f32 %v632, %v821
      %v848 = vsub.f32 %v636, %v784
      %v849 = vsub.f32 %v638, %v821
      %v850 = vsub.f32 %v642, %v784
      %v851 = vsub.f32 %v644, %v821
      %v852 = vsub.f32 %v648, %v784
      %v853 = vsub.f32 %v650, %v821
      %v854 = vsub.f32 %v654, %v784
      %v855 = vsub.f32 %v656, %v821
      %v856 = vsub.f32 %v660, %v784
      %v857 = vsub.f32 %v662, %v821
      %v858 = vsub.f32 %v666, %v784
      %v859 = vsub.f32 %v668, %v821
      %v860 = vsub.f32 %v672, %v784
      %v861 = vsub.f32 %v674, %v821
      %v862 = vsub.f32 %v678, %v784
      %v863 = vsub.f32 %v680, %v821
      %v864 = vsub.f32 %v684, %v784
      %v865 = vsub.f32 %v686, %v821
      %v866 = vsub.f32 %v690, %v784
      %v867 = vsub.f32 %v692, %v821
      %v868 = vsub.f32 %v696, %v784
      %v869 = vsub.f32 %v698, %v821
      %v870 = vsub.f32 %v702, %v784
      %v871 = vsub.f32 %v704, %v821
      %v872 = vsub.f32 %v708, %v784
      %v873 = vsub.f32 %v710, %v821
      %v874 = vsub.f32 %v714, %v784
      %v875 = vsub.f32 %v716, %v821
      %v876 = vsub.f32 %v720, %v784
      %v877 = vsub.f32 %v722, %v821
      %v878 = vsub.f32 %v726, %v784
      %v879 = vsub.f32 %v728, %v821
      %v880 = vsub.f32 %v732, %v784
      %v881 = vsub.f32 %v734, %v821
      %v882 = vsub.f32 %v738, %v784
      %v883 = vsub.f32 %v740, %v821
      %v884 = vsub.f32 %v744, %v784
      %v885 = vsub.f32 %v746, %v821
      %v886 = vmul.f32 %v822, 1.442695
      %v887 = vpow.pop %v886
      %v888 = vmul.f32 %v823, 1.442695
      %v889 = vpow.pop %v888
      %v890 = vmul.f32 %v824, 1.442695
      %v891 = vpow.pop %v890
      %v892 = vmul.f32 %v825, 1.442695
      %v893 = vpow.pop %v892
      %v894 = vmul.f32 %v826, 1.442695
      %v895 = vpow.pop %v894
      %v896 = vmul.f32 %v827, 1.442695
      %v897 = vpow.pop %v896
      %v898 = vmul.f32 %v828, 1.442695
      %v899 = vpow.pop %v898
      %v900 = vmul.f32 %v829, 1.442695
      %v901 = vpow.pop %v900
      %v902 = vmul.f32 %v830, 1.442695
      %v903 = vpow.pop %v902
      %v904 = vmul.f32 %v831, 1.442695
      %v905 = vpow.pop %v904
      %v906 = vmul.f32 %v832, 1.442695
      %v907 = vpow.pop %v906
      %v908 = vmul.f32 %v833, 1.442695
      %v909 = vpow.pop %v908
      %v910 = vmul.f32 %v834, 1.442695
      %v911 = vpow.pop %v910
      %v912 = vmul.f32 %v835, 1.442695
      %v913 = vpow.pop %v912
      %v914 = vmul.f32 %v836, 1.442695
      %v915 = vpow.pop %v914
      %v916 = vmul.f32 %v837, 1.442695
      %v917 = vpow.pop %v916
      %v918 = vmul.f32 %v838, 1.442695
      %v919 = vpow.pop %v918
      %v920 = vmul.f32 %v839, 1.442695
      %v921 = vpow.pop %v920
      %v922 = vmul.f32 %v840, 1.442695
      %v923 = vpow.pop %v922
      %v924 = vmul.f32 %v841, 1.442695
      %v925 = vpow.pop %v924
      %v926 = vmul.f32 %v842, 1.442695
      %v927 = vpow.pop %v926
      %v928 = vmul.f32 %v843, 1.442695
      %v929 = vpow.pop %v928
      %v930 = vmul.f32 %v844, 1.442695
      %v931 = vpow.pop %v930
      %v932 = vmul.f32 %v845, 1.442695
      %v933 = vpow.pop %v932
      %v934 = vmul.f32 %v846, 1.442695
      %v935 = vpow.pop %v934
      %v936 = vmul.f32 %v847, 1.442695
      %v937 = vpow.pop %v936
      %v938 = vmul.f32 %v848, 1.442695
      %v939 = vpow.pop %v938
      %v940 = vmul.f32 %v849, 1.442695
      %v941 = vpow.pop %v940
      %v942 = vmul.f32 %v850, 1.442695
      %v943 = vpow.pop %v942
      %v944 = vmul.f32 %v851, 1.442695
      %v945 = vpow.pop %v944
      %v946 = vmul.f32 %v852, 1.442695
      %v947 = vpow.pop %v946
      %v948 = vmul.f32 %v853, 1.442695
      %v949 = vpow.pop %v948
      %v950 = vmul.f32 %v854, 1.442695
      %v951 = vpow.pop %v950
      %v952 = vmul.f32 %v855, 1.442695
      %v953 = vpow.pop %v952
      %v954 = vmul.f32 %v856, 1.442695
      %v955 = vpow.pop %v954
      %v956 = vmul.f32 %v857, 1.442695
      %v957 = vpow.pop %v956
      %v958 = vmul.f32 %v858, 1.442695
      %v959 = vpow.pop %v958
      %v960 = vmul.f32 %v859, 1.442695
      %v961 = vpow.pop %v960
      %v962 = vmul.f32 %v860, 1.442695
      %v963 = vpow.pop %v962
      %v964 = vmul.f32 %v861, 1.442695
      %v965 = vpow.pop %v964
      %v966 = vmul.f32 %v862, 1.442695
      %v967 = vpow.pop %v966
      %v968 = vmul.f32 %v863, 1.442695
      %v969 = vpow.pop %v968
      %v970 = vmul.f32 %v864, 1.442695
      %v971 = vpow.pop %v970
      %v972 = vmul.f32 %v865, 1.442695
      %v973 = vpow.pop %v972
      %v974 = vmul.f32 %v866, 1.442695
      %v975 = vpow.pop %v974
      %v976 = vmul.f32 %v867, 1.442695
      %v977 = vpow.pop %v976
      %v978 = vmul.f32 %v868, 1.442695
      %v979 = vpow.pop %v978
      %v980 = vmul.f32 %v869, 1.442695
      %v981 = vpow.pop %v980
      %v982 = vmul.f32 %v870, 1.442695
      %v983 = vpow.pop %v982
      %v984 = vmul.f32 %v871, 1.442695
      %v985 = vpow.pop %v984
      %v986 = vmul.f32 %v872, 1.442695
      %v987 = vpow.pop %v986
      %v988 = vmul.f32 %v873, 1.442695
      %v989 = vpow.pop %v988
      %v990 = vmul.f32 %v874, 1.442695
      %v991 = vpow.pop %v990
      %v992 = vmul.f32 %v875, 1.442695
      %v993 = vpow.pop %v992
      %v994 = vmul.f32 %v876, 1.442695
      %v995 = vpow.pop %v994
      %v996 = vmul.f32 %v877, 1.442695
      %v997 = vpow.pop %v996
      %v998 = vmul.f32 %v878, 1.442695
      %v999 = vpow.pop %v998
      %v1000 = vmul.f32 %v879, 1.442695
      %v1001 = vpow.pop %v1000
      %v1002 = vmul.f32 %v880, 1.442695
      %v1003 = vpow.pop %v1002
      %v1004 = vmul.f32 %v881, 1.442695
      %v1005 = vpow.pop %v1004
      %v1006 = vmul.f32 %v882, 1.442695
      %v1007 = vpow.pop %v1006
      %v1008 = vmul.f32 %v883, 1.442695
      %v1009 = vpow.pop %v1008
      %v1010 = vmul.f32 %v884, 1.442695
      %v1011 = vpow.pop %v1010
      %v1012 = vmul.f32 %v885, 1.442695
      %v1013 = vpow.pop %v1012
      %v1014 = vadd.f32 %v887, %v891
      %v1015 = vadd.f32 %v1014, %v895
      %v1016 = vadd.f32 %v1015, %v899
      %v1017 = vadd.f32 %v1016, %v903
      %v1018 = vadd.f32 %v1017, %v907
      %v1019 = vadd.f32 %v1018, %v911
      %v1020 = vadd.f32 %v1019, %v915
      %v1021 = vadd.f32 %v1020, %v919
      %v1022 = vadd.f32 %v1021, %v923
      %v1023 = vadd.f32 %v1022, %v927
      %v1024 = vadd.f32 %v1023, %v931
      %v1025 = vadd.f32 %v1024, %v935
      %v1026 = vadd.f32 %v1025, %v939
      %v1027 = vadd.f32 %v1026, %v943
      %v1028 = vadd.f32 %v1027, %v947
      %v1029 = vadd.f32 %v1028, %v951
      %v1030 = vadd.f32 %v1029, %v955
      %v1031 = vadd.f32 %v1030, %v959
      %v1032 = vadd.f32 %v1031, %v963
      %v1033 = vadd.f32 %v1032, %v967
      %v1034 = vadd.f32 %v1033, %v971
      %v1035 = vadd.f32 %v1034, %v975
      %v1036 = vadd.f32 %v1035, %v979
      %v1037 = vadd.f32 %v1036, %v983
      %v1038 = vadd.f32 %v1037, %v987
      %v1039 = vadd.f32 %v1038, %v991
      %v1040 = vadd.f32 %v1039, %v995
      %v1041 = vadd.f32 %v1040, %v999
      %v1042 = vadd.f32 %v1041, %v1003
      %v1043 = vadd.f32 %v1042, %v1007
      %v1044 = vadd.f32 %v1043, %v1011
      %v1045 = vrot.slane %v1044, 4
      %v1046 = vadd.f32 %v1044, %v1045
      %v1047 = vrot.slane %v1046, 2
      %v1048 = vadd.f32 %v1046, %v1047
      %v1049 = vrot.slane %v1048, 1
      %v1050 = vadd.f32 %v1048, %v1049
      %v1051 = vadd.f32 %v889, %v893
      %v1052 = vadd.f32 %v1051, %v897
      %v1053 = vadd.f32 %v1052, %v901
      %v1054 = vadd.f32 %v1053, %v905
      %v1055 = vadd.f32 %v1054, %v909
      %v1056 = vadd.f32 %v1055, %v913
      %v1057 = vadd.f32 %v1056, %v917
      %v1058 = vadd.f32 %v1057, %v921
      %v1059 = vadd.f32 %v1058, %v925
      %v1060 = vadd.f32 %v1059, %v929
      %v1061 = vadd.f32 %v1060, %v933
      %v1062 = vadd.f32 %v1061, %v937
      %v1063 = vadd.f32 %v1062, %v941
      %v1064 = vadd.f32 %v1063, %v945
      %v1065 = vadd.f32 %v1064, %v949
      %v1066 = vadd.f32 %v1065, %v953
      %v1067 = vadd.f32 %v1066, %v957
      %v1068 = vadd.f32 %v1067, %v961
      %v1069 = vadd.f32 %v1068, %v965
      %v1070 = vadd.f32 %v1069, %v969
      %v1071 = vadd.f32 %v1070, %v973
      %v1072 = vadd.f32 %v1071, %v977
      %v1073 = vadd.f32 %v1072, %v981
      %v1074 = vadd.f32 %v1073, %v985
      %v1075 = vadd.f32 %v1074, %v989
      %v1076 = vadd.f32 %v1075, %v993
      %v1077 = vadd.f32 %v1076, %v997
      %v1078 = vadd.f32 %v1077, %v1001
      %v1079 = vadd.f32 %v1078, %v1005
      %v1080 = vadd.f32 %v1079, %v1009
      %v1081 = vadd.f32 %v1080, %v1013
      %v1082 = vrot.slane %v1081, 4
      %v1083 = vadd.f32 %v1081, %v1082
      %v1084 = vrot.slane %v1083, 2
      %v1085 = vadd.f32 %v1083, %v1084
      %v1086 = vrot.slane %v1085, 1
      %v1087 = vadd.f32 %v1085, %v1086
      %v1088 = vrcp.pop %v1050
      %v1089 = vrcp.pop %v1087
      %v1090 = vld [vmem:[%s193 + $0x20] sm:$0xf]
      %v1091 = vld [vmem:[%s193 + $0x28] sm:$0xf]
      %1092 = vmatprep.subr.mxu0 %v949
      %1093 = vmatpush1.msra.mxu0 %v947
      %1094 = vmatprep.subr.mxu0 %v945
      %1095 = vmatpush1.msra.mxu0 %v943
      %1096 = vmatprep.subr.mxu0 %v941
      %1097 = vmatpush1.msra.mxu0 %v939
      %1098 = vmatprep.subr.mxu0 %v937
      %1099 = vmatpush1.msra.mxu0 %v935
      %1100 = vmatprep.subr.mxu0 %v933
      %1101 = vmatpush1.msra.mxu0 %v931
      %1102 = vmatprep.subr.mxu0 %v929
      %1103 = vmatpush1.msra.mxu0 %v927
      %1104 = vmatprep.subr.mxu0 %v925
      %1105 = vmatpush1.msra.mxu0 %v923
      %1106 = vmatprep.subr.mxu0 %v921
      %1107 = vmatpush1.msra.mxu0 %v919
      %1108 = vmatprep.subr.mxu0 %v917
      %1109 = vmatpush1.msra.mxu0 %v915
      %1110 = vmatprep.subr.mxu0 %v913
      %1111 = vmatpush1.msra.mxu0 %v911
      %1112 = vmatprep.subr.mxu0 %v909
      %1113 = vmatpush1.msra.mxu0 %v907
      %1114 = vmatprep.subr.mxu0 %v905
      %1115 = vmatpush1.msra.mxu0 %v903
      %1116 = vmatprep.subr.mxu0 %v901
      %1117 = vmatpush1.msra.mxu0 %v899
      %1118 = vmatprep.subr.mxu0 %v897
      %1119 = vmatpush1.msra.mxu0 %v895
      %1120 = vmatprep.subr.mxu0 %v893
      %1121 = vmatpush1.msra.mxu0 %v891
      %1122 = vmatprep.subr.mxu0 %v889
      %1123 = vmatpush1.msra.mxu0 %v887
      %1124 = vmatprep.subr.mxu0 %v1013
      %1125 = vmatpush2.msra.mxu0 %v1011
      %1126 = vmatprep.subr.mxu0 %v1009
      %1127 = vmatpush2.msra.mxu0 %v1007
      %1128 = vmatprep.subr.mxu0 %v1005
      %1129 = vmatpush2.msra.mxu0 %v1003
      %1130 = vmatprep.subr.mxu0 %v1001
      %1131 = vmatpush2.msra.mxu0 %v999
      %1132 = vmatprep.subr.mxu0 %v997
      %1133 = vmatpush2.msra.mxu0 %v995
      %1134 = vmatprep.subr.mxu0 %v993
      %1135 = vmatpush2.msra.mxu0 %v991
      %1136 = vmatprep.subr.mxu0 %v989
      %1137 = vmatpush2.msra.mxu0 %v987
      %1138 = vmatprep.subr.mxu0 %v985
      %1139 = vmatpush2.msra.mxu0 %v983
      %1140 = vmatprep.subr.mxu0 %v981
      %1141 = vmatpush2.msra.mxu0 %v979
      %1142 = vmatprep.subr.mxu0 %v977
      %1143 = vmatpush2.msra.mxu0 %v975
      %1144 = vmatprep.subr.mxu0 %v973
      %1145 = vmatpush2.msra.mxu0 %v971
      %1146 = vmatprep.subr.mxu0 %v969
      %1147 = vmatpush2.msra.mxu0 %v967
      %1148 = vmatprep.subr.mxu0 %v965
      %1149 = vmatpush2.msra.mxu0 %v963
      %1150 = vmatprep.subr.mxu0 %v961
      %1151 = vmatpush2.msra.mxu0 %v959
      %1152 = vmatprep.subr.mxu0 %v957
      %1153 = vmatpush2.msra.mxu0 %v955
      %1154 = vmatprep.subr.mxu0 %v953
      %1155 = vmatpush2.msra.mxu0 %v951
      %1156 = vmatprep.mubr.f32.mxu0 %v1091
      %1157 = vmatmul.mubr.f32.gmra.mxu0 %v1090
      %v1158 = vpop.f32.mrf.mxu0
      %v1159 = vadd.f32 0.0, %v1158
      %v1160 = vpop.f32.mrf.mxu0
      %v1161 = vadd.f32 0.0, %v1160
      %1162 = vdwg.mxu0
      %v1163 = vmul.f32 %v1159, %v1088
      %v1164 = vmul.f32 %v1161, %v1089
      %s1165 = sld [smem:[#allocation2]]
      %v1166 = vstv %s1165
      %v1167 = vmul.f32 %v1166, %v1163
      %v1168 = vmul.f32 %v1166, %v1164
      %v1169 = vadd.f32 %v1090, %v1167
      %v1170 = vadd.f32 %v1091, %v1168
      %v1173 = vcombine.low %v1169, %v1170
      %1175 = vst [vmem:[%s198] sm:$0xff] %v1173
      %p1176 = scmp.lt.s32.totalorder %s16, 1
      %s1177 = scalar_select %p1176, %s16, 1
      %s1178 = smul.addr %s1177, 2
      %s1179 = smul.addr %s1178, 4
      %s1180 = scalar_lea.vmem %s4, %s1179
      // Predicated region
      $region37: #{texture_attention_forward.1} parent=35 // pred_check
        %p1181 = pneg %p123
      $region38: #{texture_attention_forward.1} parent=35 // pred_check_branch
        %1183 = sbr.rel (%p1181) target = $region40
      $region39: #{texture_attention_forward.1} parent=35 // pred_region
        _
      $region40: #{texture_attention_forward.1} parent=35 // pred_fallthru
        _
    $region36: #{texture_attention_forward.1} parent=5 // pred_fallthru
      _
    %p1184 = scmp.le.s32.totalorder 2, %s11
    // Predicated region
    $region41: #{texture_attention_forward.1} parent=5 // pred_check
      %p1185 = pneg %p1184
    $region42: #{texture_attention_forward.1} parent=5 // pred_check_branch
      %1187 = sbr.rel (%p1185) target = $region44
    $region43: #{texture_attention_forward.1} parent=5 // pred_region
      %s1188 = ssub.s32 %s11, 2
      // Predicated region
      $region45: #{texture_attention_forward.1} parent=43 // pred_check
        %p1189 = pneg %p129
      $region46: #{texture_attention_forward.1} parent=43 // pred_check_branch
        %1191 = sbr.rel (%p1189) target = $region48
      $region47: #{texture_attention_forward.1} parent=43 // pred_region
        %p1192 = scmp.lt.s32.totalorder %s17, 1
        %s1193 = scalar_select %p1192, %s17, 1
        %s1194 = smul.addr %s1193, 2
        %s1195 = smul.addr %s1194, 4
        %s1196 = scalar_lea.vmem %s4, %s1195
      $region48: #{texture_attention_forward.1} parent=43 // pred_fallthru
        _
    $region44: #{texture_attention_forward.1} parent=5 // pred_fallthru
      _
  $region6: #{texture_attention_forward.1} parent=0 // loop_footer
    %s15 = sadd.s32 1, %s11
  $region7: #{texture_attention_forward.1} parent=0 // loop_footer_branch
    %10 = sbr.rel target = $region3
  $region8: #{texture_attention_forward.1} parent=0 // loop_exit
    _

</llo_original>
